<compile_context>
chip_gen: v6e
topology: v6e:2x2x1
jax: 0.10.0
libtpu: 0.0.40
codegen_flags: <defaults>
</compile_context>

<pallas_src>
import functools

import jax
import jax.numpy as jnp
from jax import lax
from jax.experimental import pallas as pl
from jax.experimental.pallas import tpu as pltpu


# ---------------------------------------------------------------------------
# Kernel bodies (feature-major: x is (features, batch), batch on lanes)
# ---------------------------------------------------------------------------
def _dynamics_t(x_t, w1, b1c, w2, b2c):
    """net(x) in feature-major layout.  x_t: (in, B); w1: (hidden, in);
    b1c: (hidden, 1); w2: (out, hidden); b2c: (out, 1).  All f32."""
    h = jnp.dot(w1, x_t, preferred_element_type=jnp.float32)   # (hidden, B)
    h = jnp.tanh(h + b1c)                                       # f32 EUP tanh
    y = jnp.dot(w2, h, preferred_element_type=jnp.float32)      # (out, B)
    return y + b2c


def _odefunc_fwd_kernel(x_ref, w1_ref, b1_ref, w2_ref, b2_ref, o_ref):
    y = _dynamics_t(x_ref[...].astype(jnp.float32), w1_ref[...], b1_ref[...],
                    w2_ref[...], b2_ref[...])
    o_ref[...] = y.astype(o_ref.dtype)


def _euler_kernel(x_ref, w1_ref, b1_ref, w2_ref, b2_ref, o_ref, *,
                  n_steps, dt, unroll):
    # Hoist weight/bias loads out of the step loop: one VMEM read each, then
    # they live in vregs for the whole solve.
    w1 = w1_ref[...]
    b1 = b1_ref[...]
    w2 = w2_ref[...]
    b2 = b2_ref[...]

    def step(_, x):
        return x + dt * _dynamics_t(x, w1, b1, w2, b2)

    x_final = lax.fori_loop(0, n_steps, step,
                            x_ref[...].astype(jnp.float32), unroll=unroll)
    o_ref[...] = x_final.astype(o_ref.dtype)


# ---------------------------------------------------------------------------
# pallas_call wrappers
# ---------------------------------------------------------------------------
def _const_spec(shape):
    """Full-array block, constant index_map -> DMA'd once, stays resident."""
    return pl.BlockSpec(shape, lambda i: (0,) * len(shape))


def _pick_tile(batch):
    # Single full-batch tile whenever it trivially fits (footprint is tiny at
    # these feature dims); otherwise 512-wide lane tiles (near the measured HBM
    # roofline plateau, and an even tile count splits across v7x's two TCs).
    return batch if batch <= 1024 else 512


def odefunc_forward(t, x, params, *, tile_b=None):
    """Pallas equivalent of ODEFunc.forward(t, x).  t is unused (as in PyTorch).

    x: (batch, in_features).  Returns (batch, out_features)."""
    del t
    w1, b1c, w2, b2c = params
    batch, in_features = x.shape
    out_features = w2.shape[0]
    tile_b = _pick_tile(batch) if tile_b is None else min(tile_b, batch)

    x_t = x.T  # (in_features, batch): batch on lanes (layout plumbing only)

    y_t = pl.pallas_call(
        _odefunc_fwd_kernel,
        out_shape=jax.ShapeDtypeStruct((out_features, batch), x.dtype),
        grid=(pl.cdiv(batch, tile_b),),
        in_specs=[
            pl.BlockSpec((in_features, tile_b), lambda i: (0, i)),
            _const_spec(w1.shape),
            _const_spec(b1c.shape),
            _const_spec(w2.shape),
            _const_spec(b2c.shape),
        ],
        out_specs=pl.BlockSpec((out_features, tile_b), lambda i: (0, i)),
        compiler_params=pltpu.CompilerParams(
            dimension_semantics=("parallel",)),
    )(x_t, w1, b1c, w2, b2c)
    return y_t.T


def odefunc_integrate(x0, params, *, n_steps, dt, tile_b=None):
    """Fixed-step Euler solve of x' = net(x), fused into a single pallas_call."""
    w1, b1c, w2, b2c = params
    batch, dim = x0.shape
    assert w2.shape[0] == dim, "Euler integration needs out_features == in_features"
    tile_b = _pick_tile(batch) if tile_b is None else min(tile_b, batch)

    n_steps = int(n_steps)
    unroll = True if n_steps <= 16 else 8   # bounded unroll for long solves
    kernel = functools.partial(_euler_kernel, n_steps=n_steps, dt=float(dt),
                               unroll=unroll)

    x0_t = x0.T  # (dim, batch)
    xT_t = pl.pallas_call(
        kernel,
        out_shape=jax.ShapeDtypeStruct((dim, batch), x0.dtype),
        grid=(pl.cdiv(batch, tile_b),),
        in_specs=[
            pl.BlockSpec((dim, tile_b), lambda i: (0, i)),
            _const_spec(w1.shape),
            _const_spec(b1c.shape),
            _const_spec(w2.shape),
            _const_spec(b2c.shape),
        ],
        out_specs=pl.BlockSpec((dim, tile_b), lambda i: (0, i)),
        compiler_params=pltpu.CompilerParams(
            dimension_semantics=("parallel",)),
    )(x0_t, w1, b1c, w2, b2c)
    return xT_t.T


def init_params(key, in_features, out_features, hidden_size, dtype=jnp.float32):
    """Deterministic synthetic parameters in PyTorch Linear layout:
    W: (out, in); biases stored as (out, 1) columns for the lane-broadcast add."""
    k1, k2, k3, k4 = jax.random.split(key, 4)
    w1 = jax.random.normal(k1, (hidden_size, in_features), dtype) * 0.1
    b1 = jax.random.normal(k2, (hidden_size,), dtype) * 0.1
    w2 = jax.random.normal(k3, (out_features, hidden_size), dtype) * 0.1
    b2 = jax.random.normal(k4, (out_features,), dtype) * 0.1
    return (w1, b1.reshape(-1, 1), w2, b2.reshape(-1, 1))


# ---------------------------------------------------------------------------
# Pure-JAX references (f32, PyTorch semantics)
# ---------------------------------------------------------------------------
def _reference_forward(t, x, params):
    del t
    w1, b1c, w2, b2c = params
    h = jnp.tanh(x @ w1.T + b1c[:, 0])
    return h @ w2.T + b2c[:, 0]


def _reference_integrate(x0, params, *, n_steps, dt):
    x = x0.astype(jnp.float32)
    for _ in range(n_steps):
        x = x + dt * _reference_forward(None, x, params)
    return x


if __name__ == "__main__":
    in_features, out_features, hidden_size = 4, 4, 32
    batch = 256

    key = jax.random.PRNGKey(0)
    k_params, k_x = jax.random.split(key)
    params = init_params(k_params, in_features, out_features, hidden_size)

    x = jax.random.normal(k_x, (batch, in_features), jnp.float32)
    t = jnp.float32(0.0)   # ODE time, unused by the dynamics (as in PyTorch)

    # --- single forward evaluation (one full-batch lane-dense tile) ----------
    y = jax.block_until_ready(odefunc_forward(t, x, params))
    assert y.shape == (batch, out_features)
    y_ref = _reference_forward(t, x, params)
    assert jnp.allclose(y, y_ref, atol=2e-3, rtol=2e-3), \
        "forward mismatch vs f32 reference"

    # --- tiled path (grid=(2,), 128-wide lane tiles) must match as well ------
    y_tiled = jax.block_until_ready(odefunc_forward(t, x, params, tile_b=128))
    assert jnp.allclose(y_tiled, y_ref, atol=2e-3, rtol=2e-3), \
        "tiled forward mismatch vs f32 reference"

    # --- fused fixed-step Euler solve (amortizes launch over N evaluations) --
    n_steps, dt = 16, 0.05
    xT = jax.block_until_ready(
        odefunc_integrate(x, params, n_steps=n_steps, dt=dt))
    xT_ref = _reference_integrate(x, params, n_steps=n_steps, dt=dt)
    assert xT.shape == x.shape
    assert jnp.allclose(xT, xT_ref, atol=1e-2, rtol=1e-2), \
        "fused Euler integration mismatch vs f32 reference"

    # TODO(synk): adaptive-step ODE solvers (torchdiffeq-style) are outside the
    # module's forward() and are not implemented here.
    print("KERNEL_OK")
</pallas_src>

<mosaic_0001>
module attributes {stable_mosaic.version = 11 : i64} {
  func.func @_odefunc_fwd_kernel(%arg0: i32, %arg1: memref<4x256xf32, #tpu.memory_space<vmem>>, %arg2: memref<32x4xf32, #tpu.memory_space<vmem>>, %arg3: memref<32x1xf32, #tpu.memory_space<vmem>>, %arg4: memref<4x32xf32, #tpu.memory_space<vmem>>, %arg5: memref<4x1xf32, #tpu.memory_space<vmem>>, %arg6: memref<4x256xf32, #tpu.memory_space<vmem>>) attributes {dimension_semantics = [#tpu.dimension_semantics<parallel>], iteration_bounds = array<i64: 1>, scalar_prefetch = 0 : i64, scratch_operands = 0 : i64, tpu.core_type = #tpu.core_type<tc>, window_params = [{transform_indices = @transform_0, window_bounds = array<i64: 4, 256>}, {pipeline_mode = #tpu.pipeline_mode<synchronous>, transform_indices = @transform_1, window_bounds = array<i64: 32, 4>}, {pipeline_mode = #tpu.pipeline_mode<synchronous>, transform_indices = @transform_2, window_bounds = array<i64: 32, 1>}, {pipeline_mode = #tpu.pipeline_mode<synchronous>, transform_indices = @transform_3, window_bounds = array<i64: 4, 32>}, {pipeline_mode = #tpu.pipeline_mode<synchronous>, transform_indices = @transform_4, window_bounds = array<i64: 4, 1>}, {transform_indices = @transform_5, window_bounds = array<i64: 4, 256>}]} {
    %c0 = arith.constant 0 : index
    %c0_0 = arith.constant 0 : index
    %0 = vector.load %arg1[%c0, %c0_0] : memref<4x256xf32, #tpu.memory_space<vmem>>, vector<4x256xf32>
    %c0_1 = arith.constant 0 : index
    %c0_2 = arith.constant 0 : index
    %1 = vector.load %arg2[%c0_1, %c0_2] : memref<32x4xf32, #tpu.memory_space<vmem>>, vector<32x4xf32>
    %c0_3 = arith.constant 0 : index
    %c0_4 = arith.constant 0 : index
    %2 = vector.load %arg3[%c0_3, %c0_4] : memref<32x1xf32, #tpu.memory_space<vmem>>, vector<32x1xf32>
    %c0_5 = arith.constant 0 : index
    %c0_6 = arith.constant 0 : index
    %3 = vector.load %arg4[%c0_5, %c0_6] : memref<4x32xf32, #tpu.memory_space<vmem>>, vector<4x32xf32>
    %c0_7 = arith.constant 0 : index
    %c0_8 = arith.constant 0 : index
    %4 = vector.load %arg5[%c0_7, %c0_8] : memref<4x1xf32, #tpu.memory_space<vmem>>, vector<4x1xf32>
    %cst = arith.constant dense<0.000000e+00> : vector<32x256xf32>
    %5 = tpu.matmul %1, %0, %cst {dimension_numbers = #tpu.dot_dimension_numbers<[1], [0], [0], [1], [0, 0, 1, 1], [], []>} : vector<32x4xf32>, vector<4x256xf32>, vector<32x256xf32> -> vector<32x256xf32>
    %6 = vector.broadcast %2 : vector<32x1xf32> to vector<32x256xf32>
    %7 = arith.addf %5, %6 : vector<32x256xf32>
    %8 = math.tanh %7 : vector<32x256xf32>
    %cst_9 = arith.constant dense<0.000000e+00> : vector<4x256xf32>
    %9 = tpu.matmul %3, %8, %cst_9 {dimension_numbers = #tpu.dot_dimension_numbers<[1], [0], [0], [1], [0, 0, 1, 1], [], []>} : vector<4x32xf32>, vector<32x256xf32>, vector<4x256xf32> -> vector<4x256xf32>
    %10 = vector.broadcast %4 : vector<4x1xf32> to vector<4x256xf32>
    %11 = arith.addf %9, %10 : vector<4x256xf32>
    %c0_10 = arith.constant 0 : index
    %c0_11 = arith.constant 0 : index
    %12 = vector.load %arg6[%c0_10, %c0_11] : memref<4x256xf32, #tpu.memory_space<vmem>>, vector<4x256xf32>
    tpu.vector_store %arg6[%c0_10, %c0_11], %11 {strides = array<i32>} : memref<4x256xf32, #tpu.memory_space<vmem>>, vector<4x256xf32>,
    return
  }
  func.func @transform_0(%arg0: i32) -> (i32, i32) {
    %c0_i32 = arith.constant 0 : i32
    %c0_i32_0 = arith.constant 0 : i32
    return %c0_i32, %arg0 : i32, i32
  }
  func.func @transform_1(%arg0: i32) -> (i32, i32) {
    %c0_i32 = arith.constant 0 : i32
    %c0_i32_0 = arith.constant 0 : i32
    %c0_i32_1 = arith.constant 0 : i32
    return %c0_i32, %c0_i32_0 : i32, i32
  }
  func.func @transform_2(%arg0: i32) -> (i32, i32) {
    %c0_i32 = arith.constant 0 : i32
    %c0_i32_0 = arith.constant 0 : i32
    %c0_i32_1 = arith.constant 0 : i32
    return %c0_i32, %c0_i32_0 : i32, i32
  }
  func.func @transform_3(%arg0: i32) -> (i32, i32) {
    %c0_i32 = arith.constant 0 : i32
    %c0_i32_0 = arith.constant 0 : i32
    %c0_i32_1 = arith.constant 0 : i32
    return %c0_i32, %c0_i32_0 : i32, i32
  }
  func.func @transform_4(%arg0: i32) -> (i32, i32) {
    %c0_i32 = arith.constant 0 : i32
    %c0_i32_0 = arith.constant 0 : i32
    %c0_i32_1 = arith.constant 0 : i32
    return %c0_i32, %c0_i32_0 : i32, i32
  }
  func.func @transform_5(%arg0: i32) -> (i32, i32) {
    %c0_i32 = arith.constant 0 : i32
    %c0_i32_0 = arith.constant 0 : i32
    return %c0_i32, %arg0 : i32, i32
  }
}

</mosaic_0001>

<llo_original>
// kernel: tpu_custom_call.1
$region0: #{tpu_custom_call.1}
  #allocation0 [shape = 'u32[]', space=smem, size = 0x4, offset = 0x4, fixed_abs, tag = 'smem constant byte address 0x4 - core index']
  #allocation1 [shape = 'u32[144,128]{1,0:T(1,128)}', space=vmem, size = 0x12000, scoped, tag = 'internal scratch']
  %s0 = inlined_call_operand.vmem [shape: f32[4,256], index: 0, kind: input, shape index: {}]
  %s1 = inlined_call_operand.vmem [shape: f32[32,4], index: 1, kind: input, shape index: {}]
  %s2 = inlined_call_operand.vmem [shape: f32[32,1], index: 2, kind: input, shape index: {}]
  %s3 = inlined_call_operand.vmem [shape: f32[4,32], index: 3, kind: input, shape index: {}]
  %s4 = inlined_call_operand.vmem [shape: f32[4,1], index: 4, kind: input, shape index: {}]
  %s5 = inlined_call_operand.hbm [shape: f32[4,256], index: 5, kind: output, shape index: {}]
  %s6 = sld [smem:[#allocation0]]
  $region30: #{tpu_custom_call.1} parent=0
    _
  %s8 = ssub.s32 1, %s6
  %s9 = scalar_select 0, %s8, %s6
  $region1: #{tpu_custom_call.1} parent=0
    #allocation2 [shape = 'u8[4096]{0}', space=vmem, size = 0x1000, scoped, tag = 'output window, operand 0, single buffered']
    #allocation3 [shape = 's32[1]{0}', space=sflag, size = 0x4, scoped, tag = 'scoped memory for tpu_custom_call.1']
    %10 = vsyncpa [#allocation3], 0
    // Predicated region
    $region2: #{tpu_custom_call.1} parent=1 // pred_check
      _
    $region3: #{tpu_custom_call.1} parent=1 // pred_check_branch
      %12 = sbr.rel (0) target = $region5
    $region4: #{tpu_custom_call.1} parent=1 // pred_region
      _
    $region5: #{tpu_custom_call.1} parent=1 // pred_fallthru
      _
    // Predicated region
    $region6: #{tpu_custom_call.1} parent=1 // pred_check
      _
    $region7: #{tpu_custom_call.1} parent=1 // pred_check_branch
      %14 = sbr.rel (0) target = $region9
    $region8: #{tpu_custom_call.1} parent=1 // pred_region
      _
    $region9: #{tpu_custom_call.1} parent=1 // pred_fallthru
      _
    // Predicated region
    $region10: #{tpu_custom_call.1} parent=1 // pred_check
      _
    $region11: #{tpu_custom_call.1} parent=1 // pred_check_branch
      %16 = sbr.rel (0) target = $region13
    $region12: #{tpu_custom_call.1} parent=1 // pred_region
      _
    $region13: #{tpu_custom_call.1} parent=1 // pred_fallthru
      _
    // Predicated region
    $region14: #{tpu_custom_call.1} parent=1 // pred_check
      _
    $region15: #{tpu_custom_call.1} parent=1 // pred_check_branch
      %18 = sbr.rel (0) target = $region17
    $region16: #{tpu_custom_call.1} parent=1 // pred_region
      _
    $region17: #{tpu_custom_call.1} parent=1 // pred_fallthru
      _
    // Predicated region
    $region18: #{tpu_custom_call.1} parent=1 // pred_check
      _
    $region19: #{tpu_custom_call.1} parent=1 // pred_check_branch
      %20 = sbr.rel (0) target = $region21
    $region20: #{tpu_custom_call.1} parent=1 // pred_region
      _
    $region21: #{tpu_custom_call.1} parent=1 // pred_fallthru
      _
    %v21 = vld [vmem:[%s0] sm:$0xff]
    %v22 = vld [vmem:[%s1] sm:$0xff]
    %v23 = vld [vmem:[%s1 + $0x8] sm:$0xff]
    %v24 = vld [vmem:[%s1 + $0x10] sm:$0xff]
    %v25 = vld [vmem:[%s1 + $0x18] sm:$0xff]
    %v26 = vld [vmem:[%s2] sm:$0xff]
    %v27 = vld [vmem:[%s2 + $0x8] sm:$0xff]
    %v28 = vld [vmem:[%s2 + $0x10] sm:$0xff]
    %v29 = vld [vmem:[%s2 + $0x18] sm:$0xff]
    %v30 = vld [vmem:[%s3] sm:$0xf]
    %v31 = vld [vmem:[%s4] sm:$0xf]
    %33 = vset.pattern.permute.xlu0 0
    %34 = vperm.xlu0 %33, %v26
    %v35 = vpop.permute.xlu0 %34
    %38 = vset.pattern.permute.xlu0 0
    %39 = vperm.xlu0 %38, %v27
    %v40 = vpop.permute.xlu0 %39
    %43 = vset.pattern.permute.xlu0 0
    %44 = vperm.xlu0 %43, %v28
    %v45 = vpop.permute.xlu0 %44
    %48 = vset.pattern.permute.xlu0 0
    %49 = vperm.xlu0 %48, %v29
    %v50 = vpop.permute.xlu0 %49
    %v53 = vcombine.high %v21, %v21
    %vm54 = vcmask 31744
    %v56 = vsel %vm54, %v22, 0
    %v59 = vsel %vm54, %v23, 0
    %v62 = vsel %vm54, %v24, 0
    %v65 = vsel %vm54, %v25, 0
    %vm67 = vcmask 1043456
    %v68 = vsel %vm67, %v21, 0
    %v70 = vsel %vm67, %v53, 0
    %72 = vmatprep.subr.mxu0 0.0
    %73 = vmatpush1.msra.mxu0 0.0
    %74 = vmatprep.subr.mxu0 0.0
    %75 = vmatpush1.msra.mxu0 0.0
    %76 = vmatprep.subr.mxu0 0.0
    %77 = vmatpush1.msra.mxu0 0.0
    %78 = vmatprep.subr.mxu0 0.0
    %79 = vmatpush1.msra.mxu0 0.0
    %80 = vmatprep.subr.mxu0 0.0
    %81 = vmatpush1.msra.mxu0 0.0
    %82 = vmatprep.subr.mxu0 0.0
    %83 = vmatpush1.msra.mxu0 0.0
    %84 = vmatprep.subr.mxu0 0.0
    %85 = vmatpush1.msra.mxu0 0.0
    %86 = vmatprep.subr.mxu0 0.0
    %87 = vmatpush1.msra.mxu0 0.0
    %88 = vmatprep.subr.mxu0 0.0
    %89 = vmatpush1.msra.mxu0 0.0
    %90 = vmatprep.subr.mxu0 0.0
    %91 = vmatpush1.msra.mxu0 0.0
    %92 = vmatprep.subr.mxu0 0.0
    %93 = vmatpush1.msra.mxu0 0.0
    %94 = vmatprep.subr.mxu0 0.0
    %95 = vmatpush1.msra.mxu0 0.0
    %96 = vmatprep.subr.mxu0 0.0
    %97 = vmatpush1.msra.mxu0 0.0
    %98 = vmatprep.subr.mxu0 0.0
    %99 = vmatpush1.msra.mxu0 0.0
    %100 = vmatprep.subr.mxu0 0.0
    %101 = vmatpush1.msra.mxu0 0.0
    %102 = vmatprep.subr.mxu0 %v70
    %103 = vmatpush1.msra.mxu0 %v68
    %104 = vmatprep.subr.mxu0 0.0
    %105 = vmatpush2.msra.mxu0 0.0
    %106 = vmatprep.subr.mxu0 0.0
    %107 = vmatpush2.msra.mxu0 0.0
    %108 = vmatprep.subr.mxu0 0.0
    %109 = vmatpush2.msra.mxu0 0.0
    %110 = vmatprep.subr.mxu0 0.0
    %111 = vmatpush2.msra.mxu0 0.0
    %112 = vmatprep.subr.mxu0 0.0
    %113 = vmatpush2.msra.mxu0 0.0
    %114 = vmatprep.subr.mxu0 0.0
    %115 = vmatpush2.msra.mxu0 0.0
    %116 = vmatprep.subr.mxu0 0.0
    %117 = vmatpush2.msra.mxu0 0.0
    %118 = vmatprep.subr.mxu0 0.0
    %119 = vmatpush2.msra.mxu0 0.0
    %120 = vmatprep.subr.mxu0 0.0
    %121 = vmatpush2.msra.mxu0 0.0
    %122 = vmatprep.subr.mxu0 0.0
    %123 = vmatpush2.msra.mxu0 0.0
    %124 = vmatprep.subr.mxu0 0.0
    %125 = vmatpush2.msra.mxu0 0.0
    %126 = vmatprep.subr.mxu0 0.0
    %127 = vmatpush2.msra.mxu0 0.0
    %128 = vmatprep.subr.mxu0 0.0
    %129 = vmatpush2.msra.mxu0 0.0
    %130 = vmatprep.subr.mxu0 0.0
    %131 = vmatpush2.msra.mxu0 0.0
    %132 = vmatprep.subr.mxu0 0.0
    %133 = vmatpush2.msra.mxu0 0.0
    %134 = vmatprep.subr.mxu0 0.0
    %135 = vmatpush2.msra.mxu0 0.0
    %136 = vmatprep.mubr.f32.mxu0 0.0
    %137 = vmatmul.mubr.f32.gmra.mxu0 %v56
    %v138 = vpop.f32.mrf.mxu0
    %v139 = vadd.f32 %v35, %v138
    %v140 = vpop.f32.mrf.mxu0
    %v141 = vadd.f32 %v35, %v140
    %142 = vmatprep.mubr.f32.mxu0 0.0
    %143 = vmatmul.mubr.f32.gmra.mxu0 %v59
    %v144 = vpop.f32.mrf.mxu0
    %v145 = vadd.f32 %v40, %v144
    %v146 = vpop.f32.mrf.mxu0
    %v147 = vadd.f32 %v40, %v146
    %148 = vmatprep.mubr.f32.mxu0 0.0
    %149 = vmatmul.mubr.f32.gmra.mxu0 %v62
    %v150 = vpop.f32.mrf.mxu0
    %v151 = vadd.f32 %v45, %v150
    %v152 = vpop.f32.mrf.mxu0
    %v153 = vadd.f32 %v45, %v152
    %154 = vmatprep.mubr.f32.mxu0 0.0
    %155 = vmatmul.mubr.f32.gmra.mxu0 %v65
    %v156 = vpop.f32.mrf.mxu0
    %v157 = vadd.f32 %v50, %v156
    %v158 = vpop.f32.mrf.mxu0
    %v159 = vadd.f32 %v50, %v158
    %160 = vdwg.mxu0
    %v161 = vtanh.pop %v139
    %v162 = vtanh.pop %v141
    %v163 = vtanh.pop %v145
    %v164 = vtanh.pop %v147
    %v165 = vtanh.pop %v151
    %v166 = vtanh.pop %v153
    %v167 = vtanh.pop %v157
    %v168 = vtanh.pop %v159
    %170 = vset.pattern.permute.xlu0 0
    %171 = vperm.xlu0 %170, %v31
    %v172 = vpop.permute.xlu0 %171
    %vm174 = vcmask 261120
    %v176 = vsel %vm174, %v30, 0
    %178 = vmatprep.subr.mxu0 0.0
    %179 = vmatpush1.msra.mxu0 0.0
    %180 = vmatprep.subr.mxu0 0.0
    %181 = vmatpush1.msra.mxu0 0.0
    %182 = vmatprep.subr.mxu0 0.0
    %183 = vmatpush1.msra.mxu0 0.0
    %184 = vmatprep.subr.mxu0 0.0
    %185 = vmatpush1.msra.mxu0 0.0
    %186 = vmatprep.subr.mxu0 0.0
    %187 = vmatpush1.msra.mxu0 0.0
    %188 = vmatprep.subr.mxu0 0.0
    %189 = vmatpush1.msra.mxu0 0.0
    %190 = vmatprep.subr.mxu0 0.0
    %191 = vmatpush1.msra.mxu0 0.0
    %192 = vmatprep.subr.mxu0 0.0
    %193 = vmatpush1.msra.mxu0 0.0
    %194 = vmatprep.subr.mxu0 0.0
    %195 = vmatpush1.msra.mxu0 0.0
    %196 = vmatprep.subr.mxu0 0.0
    %197 = vmatpush1.msra.mxu0 0.0
    %198 = vmatprep.subr.mxu0 0.0
    %199 = vmatpush1.msra.mxu0 0.0
    %200 = vmatprep.subr.mxu0 0.0
    %201 = vmatpush1.msra.mxu0 0.0
    %202 = vmatprep.subr.mxu0 %v168
    %203 = vmatpush1.msra.mxu0 %v167
    %204 = vmatprep.subr.mxu0 %v166
    %205 = vmatpush1.msra.mxu0 %v165
    %206 = vmatprep.subr.mxu0 %v164
    %207 = vmatpush1.msra.mxu0 %v163
    %208 = vmatprep.subr.mxu0 %v162
    %209 = vmatpush1.msra.mxu0 %v161
    %210 = vmatprep.subr.mxu0 0.0
    %211 = vmatpush2.msra.mxu0 0.0
    %212 = vmatprep.subr.mxu0 0.0
    %213 = vmatpush2.msra.mxu0 0.0
    %214 = vmatprep.subr.mxu0 0.0
    %215 = vmatpush2.msra.mxu0 0.0
    %216 = vmatprep.subr.mxu0 0.0
    %217 = vmatpush2.msra.mxu0 0.0
    %218 = vmatprep.subr.mxu0 0.0
    %219 = vmatpush2.msra.mxu0 0.0
    %220 = vmatprep.subr.mxu0 0.0
    %221 = vmatpush2.msra.mxu0 0.0
    %222 = vmatprep.subr.mxu0 0.0
    %223 = vmatpush2.msra.mxu0 0.0
    %224 = vmatprep.subr.mxu0 0.0
    %225 = vmatpush2.msra.mxu0 0.0
    %226 = vmatprep.subr.mxu0 0.0
    %227 = vmatpush2.msra.mxu0 0.0
    %228 = vmatprep.subr.mxu0 0.0
    %229 = vmatpush2.msra.mxu0 0.0
    %230 = vmatprep.subr.mxu0 0.0
    %231 = vmatpush2.msra.mxu0 0.0
    %232 = vmatprep.subr.mxu0 0.0
    %233 = vmatpush2.msra.mxu0 0.0
    %234 = vmatprep.subr.mxu0 0.0
    %235 = vmatpush2.msra.mxu0 0.0
    %236 = vmatprep.subr.mxu0 0.0
    %237 = vmatpush2.msra.mxu0 0.0
    %238 = vmatprep.subr.mxu0 0.0
    %239 = vmatpush2.msra.mxu0 0.0
    %240 = vmatprep.subr.mxu0 0.0
    %241 = vmatpush2.msra.mxu0 0.0
    %242 = vmatprep.mubr.f32.mxu0 0.0
    %243 = vmatmul.mubr.f32.gmra.mxu0 %v176
    %v244 = vpop.f32.mrf.mxu0
    %v245 = vadd.f32 %v172, %v244
    %v246 = vpop.f32.mrf.mxu0
    %v247 = vadd.f32 %v172, %v246
    %248 = vdwg.mxu0
    %v251 = vcombine.low %v245, %v247
    %253 = vst [vmem:[#allocation2] sm:$0xff] %v251
    // Predicated region
    $region22: #{tpu_custom_call.1} parent=1 // pred_check
      _
    $region23: #{tpu_custom_call.1} parent=1 // pred_check_branch
      %255 = sbr.rel (0) target = $region25
    $region24: #{tpu_custom_call.1} parent=1 // pred_region
      %s257 = ssub.s32 128, 128
      %258 = vsyncadd [#allocation3], %s257
      %s260 = sshll.u32 [#allocation2], 4
      %s261 = int_to_ptr.vmem [resolvable:$true] %s260
      %263 = dma.vmem_to_hbm [thread:$0]  %s261, 128, %s5, [#allocation3]
    $region25: #{tpu_custom_call.1} parent=1 // pred_fallthru
      _
    // Predicated region
    $region26: #{tpu_custom_call.1} parent=1 // pred_check
      _
    $region27: #{tpu_custom_call.1} parent=1 // pred_check_branch
      %265 = sbr.rel (0) target = $region29
    $region28: #{tpu_custom_call.1} parent=1 // pred_region
      %266 = dma.done [#allocation3], 128
    $region29: #{tpu_custom_call.1} parent=1 // pred_fallthru
      _
    %267 = vsyncpa [#allocation3], 1

</llo_original>
